<compile_context>
chip_gen: v7x
topology: tpu7x:2x2x1
jax: 0.10.0
libtpu: 0.0.40
codegen_flags: <defaults>
</compile_context>

<pallas_src>
import functools

import jax
import jax.numpy as jnp
import numpy as np
from jax.experimental import pallas as pl
from jax.experimental.pallas import tpu as pltpu

EPS = 1e-12


def _soft_norm_train_kernel(eps, hidden, pack, x_ref, rm_ref, rv_ref,
                            y_ref, new_rm_ref, new_rv_ref):
    """Grid-less kernel: whole (small) batch resident in one VMEM block.

    x_ref / y_ref : [rows, pack*hidden]  (pack embeddings per vreg row)
    rm_ref/rv_ref : (1,) f32 SMEM inputs  (running buffers)
    new_rm/new_rv : (1,) f32 SMEM outputs (EMA-updated buffers)
    """
    x = x_ref[...].astype(jnp.float32)

    # Per-embedding squared L2 norms via static lane-segment reductions.
    norm_cols = []
    for j in range(pack):
        seg = x[:, j * hidden:(j + 1) * hidden]
        norm_cols.append(jnp.sqrt(jnp.sum(seg * seg, axis=1, keepdims=True)))

    n_embeddings = x.shape[0] * pack
    inv_count = 1.0 / float(n_embeddings)

    total = norm_cols[0]
    for col in norm_cols[1:]:
        total = total + col
    mean_n = jnp.sum(total) * inv_count          # scalar mean of the norms
    u = mean_n + eps

    sq_dev = (norm_cols[0] - mean_n) ** 2
    for col in norm_cols[1:]:
        sq_dev = sq_dev + (col - mean_n) ** 2
    var_n = jnp.sum(sq_dev) * inv_count          # biased variance (unbiased=False)

    denom = u + jnp.sqrt(jnp.maximum(var_n, eps))
    inv_denom = 1.0 / denom                      # single reciprocal, then VPU muls
    y_ref[...] = (x * inv_denom).astype(y_ref.dtype)

    # Fused EMA update of the running buffers (scalar SMEM outputs).
    new_rm_ref[0] = rm_ref[0] * 0.99 + 0.01 * u
    new_rv_ref[0] = rv_ref[0] * 0.99 + 0.01 * var_n


def soft_normalization(x, running_mean, running_var, training=True, eps=EPS):
    """Functional SoftNormalization forward.

    Returns (y, new_running_mean, new_running_var); in eval mode the running
    buffers are returned unchanged.
    """
    batch, hidden = x.shape
    rm = jnp.asarray(running_mean, jnp.float32).reshape((1,))
    rv = jnp.asarray(running_var, jnp.float32).reshape((1,))

    if not training:
        # Uniform scalar scale; a kernel launch here is pure overhead (perf
        # review), so let XLA compute / fuse it with neighboring ops.
        denom = rm[0] + jnp.sqrt(jnp.maximum(rv[0], jnp.float32(eps)))
        y = (x.astype(jnp.float32) * (1.0 / denom)).astype(x.dtype)
        return y, running_mean, running_var

    # Lane-dense packing for the scale/store phase (H=32 uses only 32 of 128
    # lanes otherwise): pack 128//H embeddings per vreg row when it divides.
    if hidden % 128 != 0 and 128 % hidden == 0 and (batch * hidden) % 128 == 0:
        pack = 128 // hidden
        x_in = x.reshape(batch // pack, pack * hidden)
    else:
        # Already lane-dense (hidden % 128 == 0) or not cleanly packable.
        # TODO(synk): pad `hidden` up to a lane multiple for the general case.
        pack = 1
        x_in = x

    vmem = pl.BlockSpec(memory_space=pltpu.MemorySpace.VMEM)
    smem = pl.BlockSpec(memory_space=pltpu.MemorySpace.SMEM)

    # Grid-less whole-array block: fine for the small batches this module sees.
    # Raise the scoped-VMEM limit only when actually needed (v5e default scope
    # is 16 MiB); cap at v7x's 64 MiB physical VMEM.
    # TODO(synk): for large batches switch to a tiled two-pass grid (stats pass
    # + scale pass, batch axis marked "parallel" for v7x's two TensorCores).
    approx_vmem_bytes = 3 * x_in.size * 4 + (1 << 20)
    compiler_params = None
    if approx_vmem_bytes > (16 << 20):
        compiler_params = pltpu.CompilerParams(
            vmem_limit_bytes=int(min(approx_vmem_bytes, 64 << 20)))

    y_packed, new_rm, new_rv = pl.pallas_call(
        functools.partial(_soft_norm_train_kernel, float(eps), hidden, pack),
        out_shape=(
            jax.ShapeDtypeStruct(x_in.shape, x.dtype),
            jax.ShapeDtypeStruct((1,), jnp.float32),
            jax.ShapeDtypeStruct((1,), jnp.float32),
        ),
        in_specs=[vmem, smem, smem],
        out_specs=(vmem, smem, smem),
        compiler_params=compiler_params,
    )(x_in, rm, rv)

    return y_packed.reshape(x.shape), new_rm, new_rv


def _reference_train(x, running_mean, running_var, eps=EPS):
    x32 = x.astype(jnp.float32)
    norms = jnp.sqrt(jnp.sum(x32 * x32, axis=1))
    mean_n = jnp.mean(norms)
    u = mean_n + eps
    s = jnp.mean((norms - mean_n) ** 2)
    y = (x32 / (u + jnp.sqrt(jnp.maximum(s, eps)))).astype(x.dtype)
    new_rm = running_mean * 0.99 + 0.01 * u
    new_rv = running_var * 0.99 + 0.01 * s
    return y, new_rm, new_rv


if __name__ == "__main__":
    key = jax.random.PRNGKey(0)
    B, H = 8, 32  # batch of embeddings, hidden_size=32
    x = jax.random.normal(key, (B, H), dtype=jnp.float32)

    # Buffers initialized as in __init__: zeros(1) / ones(1).
    running_mean = jnp.zeros((1,), jnp.float32)
    running_var = jnp.ones((1,), jnp.float32)

    # Training-mode forward (packed lane-dense path: [8,32] -> [2,128]).
    y, new_rm, new_rv = soft_normalization(x, running_mean, running_var, training=True)
    jax.block_until_ready((y, new_rm, new_rv))
    y_ref, rm_ref_v, rv_ref_v = _reference_train(x, running_mean, running_var)
    assert np.allclose(np.asarray(y), np.asarray(y_ref), rtol=1e-5, atol=1e-5)
    assert np.allclose(np.asarray(new_rm), np.asarray(rm_ref_v), rtol=1e-5, atol=1e-6)
    assert np.allclose(np.asarray(new_rv), np.asarray(rv_ref_v), rtol=1e-5, atol=1e-6)

    # Training-mode forward, plain path (H does not pack evenly into 128 lanes).
    x2 = jax.random.normal(jax.random.PRNGKey(1), (B, 48), dtype=jnp.float32)
    y2, rm2, rv2 = soft_normalization(x2, running_mean, running_var, training=True)
    jax.block_until_ready((y2, rm2, rv2))
    y2_ref, rm2_ref, rv2_ref = _reference_train(x2, running_mean, running_var)
    assert np.allclose(np.asarray(y2), np.asarray(y2_ref), rtol=1e-5, atol=1e-5)
    assert np.allclose(np.asarray(rm2), np.asarray(rm2_ref), rtol=1e-5, atol=1e-6)
    assert np.allclose(np.asarray(rv2), np.asarray(rv2_ref), rtol=1e-5, atol=1e-6)

    # Eval-mode forward (uses the updated running buffers; plain-XLA scalar scale).
    y_eval, _, _ = soft_normalization(x, new_rm, new_rv, training=False)
    jax.block_until_ready(y_eval)
    denom = new_rm[0] + jnp.sqrt(jnp.maximum(new_rv[0], EPS))
    assert np.allclose(np.asarray(y_eval), np.asarray(x / denom), rtol=1e-5, atol=1e-5)

    print("KERNEL_OK")
</pallas_src>

<mosaic_0001>
module attributes {stable_mosaic.version = 11 : i64} {
  func.func @_soft_norm_train_kernel(%arg0: memref<2x128xf32, #tpu.memory_space<vmem>>, %arg1: memref<1xf32, #tpu.memory_space<smem>>, %arg2: memref<1xf32, #tpu.memory_space<smem>>, %arg3: memref<2x128xf32, #tpu.memory_space<vmem>>, %arg4: memref<1xf32, #tpu.memory_space<smem>>, %arg5: memref<1xf32, #tpu.memory_space<smem>>) attributes {dimension_semantics = [], scalar_prefetch = 0 : i64, scratch_operands = 0 : i64, tpu.core_type = #tpu.core_type<tc>} {
    %c0 = arith.constant 0 : index
    %c0_0 = arith.constant 0 : index
    %0 = vector.load %arg0[%c0, %c0_0] : memref<2x128xf32, #tpu.memory_space<vmem>>, vector<2x128xf32>
    %1 = vector.extract_strided_slice %0 {offsets = [0, 0], sizes = [2, 32], strides = [1, 1]} : vector<2x128xf32> to vector<2x32xf32>
    %2 = arith.mulf %1, %1 : vector<2x32xf32>
    %cst = arith.constant dense<0.000000e+00> : vector<2xf32>
    %3 = vector.multi_reduction <add>, %2, %cst [1] : vector<2x32xf32> to vector<2xf32>
    %4 = vector.shape_cast %3 : vector<2xf32> to vector<2x1xf32>
    %5 = math.sqrt %4 : vector<2x1xf32>
    %6 = vector.extract_strided_slice %0 {offsets = [0, 32], sizes = [2, 32], strides = [1, 1]} : vector<2x128xf32> to vector<2x32xf32>
    %7 = arith.mulf %6, %6 : vector<2x32xf32>
    %cst_1 = arith.constant dense<0.000000e+00> : vector<2xf32>
    %8 = vector.multi_reduction <add>, %7, %cst_1 [1] : vector<2x32xf32> to vector<2xf32>
    %9 = vector.shape_cast %8 : vector<2xf32> to vector<2x1xf32>
    %10 = math.sqrt %9 : vector<2x1xf32>
    %11 = vector.extract_strided_slice %0 {offsets = [0, 64], sizes = [2, 32], strides = [1, 1]} : vector<2x128xf32> to vector<2x32xf32>
    %12 = arith.mulf %11, %11 : vector<2x32xf32>
    %cst_2 = arith.constant dense<0.000000e+00> : vector<2xf32>
    %13 = vector.multi_reduction <add>, %12, %cst_2 [1] : vector<2x32xf32> to vector<2xf32>
    %14 = vector.shape_cast %13 : vector<2xf32> to vector<2x1xf32>
    %15 = math.sqrt %14 : vector<2x1xf32>
    %16 = vector.extract_strided_slice %0 {offsets = [0, 96], sizes = [2, 32], strides = [1, 1]} : vector<2x128xf32> to vector<2x32xf32>
    %17 = arith.mulf %16, %16 : vector<2x32xf32>
    %cst_3 = arith.constant dense<0.000000e+00> : vector<2xf32>
    %18 = vector.multi_reduction <add>, %17, %cst_3 [1] : vector<2x32xf32> to vector<2xf32>
    %19 = vector.shape_cast %18 : vector<2xf32> to vector<2x1xf32>
    %20 = math.sqrt %19 : vector<2x1xf32>
    %21 = arith.addf %5, %10 : vector<2x1xf32>
    %22 = arith.addf %21, %15 : vector<2x1xf32>
    %23 = arith.addf %22, %20 : vector<2x1xf32>
    %24 = vector.shape_cast %23 : vector<2x1xf32> to vector<1x2x1xf32>
    %cst_4 = arith.constant dense<0.000000e+00> : vector<1xf32>
    %25 = vector.multi_reduction <add>, %24, %cst_4 [1, 2] : vector<1x2x1xf32> to vector<1xf32>
    %26 = vector.shape_cast %25 : vector<1xf32> to vector<1x1x1xf32>
    %27 = vector.extract %26[0, 0, 0] : f32 from vector<1x1x1xf32>
    %cst_5 = arith.constant 1.250000e-01 : f32
    %28 = arith.mulf %27, %cst_5 : f32
    %cst_6 = arith.constant 9.99999996E-13 : f32
    %29 = arith.addf %28, %cst_6 : f32
    %30 = vector.broadcast %28 : f32 to vector<2x1xf32>
    %31 = arith.subf %5, %30 : vector<2x1xf32>
    %32 = arith.mulf %31, %31 : vector<2x1xf32>
    %33 = vector.broadcast %28 : f32 to vector<2x1xf32>
    %34 = arith.subf %10, %33 : vector<2x1xf32>
    %35 = arith.mulf %34, %34 : vector<2x1xf32>
    %36 = arith.addf %32, %35 : vector<2x1xf32>
    %37 = vector.broadcast %28 : f32 to vector<2x1xf32>
    %38 = arith.subf %15, %37 : vector<2x1xf32>
    %39 = arith.mulf %38, %38 : vector<2x1xf32>
    %40 = arith.addf %36, %39 : vector<2x1xf32>
    %41 = vector.broadcast %28 : f32 to vector<2x1xf32>
    %42 = arith.subf %20, %41 : vector<2x1xf32>
    %43 = arith.mulf %42, %42 : vector<2x1xf32>
    %44 = arith.addf %40, %43 : vector<2x1xf32>
    %45 = vector.shape_cast %44 : vector<2x1xf32> to vector<1x2x1xf32>
    %cst_7 = arith.constant dense<0.000000e+00> : vector<1xf32>
    %46 = vector.multi_reduction <add>, %45, %cst_7 [1, 2] : vector<1x2x1xf32> to vector<1xf32>
    %47 = vector.shape_cast %46 : vector<1xf32> to vector<1x1x1xf32>
    %48 = vector.extract %47[0, 0, 0] : f32 from vector<1x1x1xf32>
    %cst_8 = arith.constant 1.250000e-01 : f32
    %49 = arith.mulf %48, %cst_8 : f32
    %cst_9 = arith.constant 9.99999996E-13 : f32
    %50 = arith.maximumf %49, %cst_9 : f32
    %51 = math.sqrt %50 : f32
    %52 = arith.addf %29, %51 : f32
    %cst_10 = arith.constant 1.000000e+00 : f32
    %53 = arith.divf %cst_10, %52 : f32
    %54 = vector.broadcast %53 : f32 to vector<2x128xf32>
    %55 = arith.mulf %0, %54 : vector<2x128xf32>
    %c0_11 = arith.constant 0 : index
    %c0_12 = arith.constant 0 : index
    %56 = vector.load %arg3[%c0_11, %c0_12] : memref<2x128xf32, #tpu.memory_space<vmem>>, vector<2x128xf32>
    tpu.vector_store %arg3[%c0_11, %c0_12], %55 {strides = array<i32>} : memref<2x128xf32, #tpu.memory_space<vmem>>, vector<2x128xf32>,
    %c0_13 = arith.constant 0 : index
    %57 = memref.load %arg1[%c0_13] : memref<1xf32, #tpu.memory_space<smem>>
    %cst_14 = arith.constant 9.900000e-01 : f32
    %58 = arith.mulf %57, %cst_14 : f32
    %cst_15 = arith.constant 0.00999999977 : f32
    %59 = arith.mulf %cst_15, %29 : f32
    %60 = arith.addf %58, %59 : f32
    %c0_16 = arith.constant 0 : index
    %61 = memref.load %arg4[%c0_16] : memref<1xf32, #tpu.memory_space<smem>>
    memref.store %60, %arg4[%c0_16] : memref<1xf32, #tpu.memory_space<smem>>
    %c0_17 = arith.constant 0 : index
    %62 = memref.load %arg2[%c0_17] : memref<1xf32, #tpu.memory_space<smem>>
    %cst_18 = arith.constant 9.900000e-01 : f32
    %63 = arith.mulf %62, %cst_18 : f32
    %cst_19 = arith.constant 0.00999999977 : f32
    %64 = arith.mulf %cst_19, %49 : f32
    %65 = arith.addf %63, %64 : f32
    %c0_20 = arith.constant 0 : index
    %66 = memref.load %arg5[%c0_20] : memref<1xf32, #tpu.memory_space<smem>>
    memref.store %65, %arg5[%c0_20] : memref<1xf32, #tpu.memory_space<smem>>
    return
  }
}

</mosaic_0001>

<llo_original>
// kernel: tpu_custom_call.1
$region0: #{tpu_custom_call.1}
  #allocation0 [shape = 'u32[]', space=smem, size = 0x4, offset = 0x4, fixed_abs, tag = 'smem constant byte address 0x4 - core index']
  #allocation1 [shape = 'u32[144,128]{1,0:T(1,128)}', space=vmem, size = 0x12000, scoped, tag = 'internal scratch']
  #allocation2 [shape = 'f32[1]{0:T(128)S(6)}', space=smem, size = 0x200, scoped, tag = 'scoped memory for tpu_custom_call.1']
  #allocation3 [shape = 'f32[1]{0:T(128)S(6)}', space=smem, size = 0x200, scoped, tag = 'scoped memory for tpu_custom_call.1']
  %s0 = inlined_call_operand.vmem [shape: f32[2,128], index: 0, kind: input, shape index: {}]
  %s1 = inlined_call_operand.<no memory space> [shape: f32[1], index: 1, kind: input, shape index: {}]
  %s2 = inlined_call_operand.<no memory space> [shape: f32[1], index: 2, kind: input, shape index: {}]
  %s3 = inlined_call_operand.hbm [shape: f32[2,128], index: 3, kind: output, shape index: {0}]
  %s4 = inlined_call_operand.hbm [shape: f32[1], index: 4, kind: output, shape index: {1}]
  %s5 = inlined_call_operand.hbm [shape: f32[1], index: 5, kind: output, shape index: {2}]
  %6 = xla_tuple %s3, %s4, %s5
  %s7 = sld [smem:[#allocation0]]
  $region38: #{tpu_custom_call.1} parent=0
    _
  %s9 = ssub.s32 1, %s7
  %s10 = scalar_select 0, %s9, %s7
  %11 = sst [smem:[#allocation2]] %s1
  %12 = sst [smem:[#allocation3]] %s2
  $region1: #{tpu_custom_call.1} parent=0
    #allocation4 [shape = 'u8[1024]{0}', space=vmem, size = 0x400, scoped, tag = 'output window, operand 0, single buffered']
    #allocation5 [shape = 's32[1]{0}', space=sflag, size = 0x4, scoped, tag = 'scoped memory for tpu_custom_call.1']
    #allocation6 [shape = 's32[1]{0}', space=sflag, size = 0x4, scoped, tag = 'scoped memory for tpu_custom_call.1']
    #allocation7 [shape = 'u8[512]{0}', space=smem, size = 0x200, scoped, tag = 'output window, operand 1, single buffered']
    #allocation8 [shape = 'u8[512]{0}', space=smem, size = 0x200, scoped, tag = 'output window, operand 2, single buffered']
    #allocation9 [shape = 's32[1]{0}', space=sflag, size = 0x4, scoped, tag = 'scoped memory for tpu_custom_call.1']
    %13 = vsyncpa [#allocation5], 0
    %14 = vsyncpa [#allocation6], 0
    %15 = vsyncpa [#allocation9], 0
    // Predicated region
    $region2: #{tpu_custom_call.1} parent=1 // pred_check
      _
    $region3: #{tpu_custom_call.1} parent=1 // pred_check_branch
      %17 = sbr.rel (0) target = $region5
    $region4: #{tpu_custom_call.1} parent=1 // pred_region
      _
    $region5: #{tpu_custom_call.1} parent=1 // pred_fallthru
      _
    // Predicated region
    $region6: #{tpu_custom_call.1} parent=1 // pred_check
      _
    $region7: #{tpu_custom_call.1} parent=1 // pred_check_branch
      %19 = sbr.rel (0) target = $region9
    $region8: #{tpu_custom_call.1} parent=1 // pred_region
      _
    $region9: #{tpu_custom_call.1} parent=1 // pred_fallthru
      _
    // Predicated region
    $region10: #{tpu_custom_call.1} parent=1 // pred_check
      _
    $region11: #{tpu_custom_call.1} parent=1 // pred_check_branch
      %21 = sbr.rel (0) target = $region13
    $region12: #{tpu_custom_call.1} parent=1 // pred_region
      _
    $region13: #{tpu_custom_call.1} parent=1 // pred_fallthru
      _
    %v22 = vld [vmem:[%s0] sm:$0x3]
    %v23 = vmul.f32 %v22, %v22
    %vm24 = vcmask 254976
    %v25 = vsel %vm24, %v23, 0.0
    %26 = vadd.xlane.f32.xlu0 %v25
    %v27 = vpop.xlane.xlu0 %26
    %v28 = vrsqrt.pop %v27
    %v29 = vmul.f32 %v27, %v28
    %vm30 = vcmp.eq.f32.partialorder %v27, inf
    %v31 = vsel %vm30, %v27, %v29
    %vm32 = vcmp.eq.f32.partialorder %v27, 0.0
    %v33 = vand.u32 %v27, 2147483648
    %v34 = vsel %vm32, %v33, %v31
    %36 = vrot.lane.b32.xlu0 %v23, 96
    %v37 = vpop.permute.xlu0 %36
    %v39 = vsel %vm24, %v37, 0.0
    %40 = vadd.xlane.f32.xlu0 %v39
    %v41 = vpop.xlane.xlu0 %40
    %v42 = vrsqrt.pop %v41
    %v43 = vmul.f32 %v41, %v42
    %vm44 = vcmp.eq.f32.partialorder %v41, inf
    %v45 = vsel %vm44, %v41, %v43
    %vm46 = vcmp.eq.f32.partialorder %v41, 0.0
    %v47 = vand.u32 %v41, 2147483648
    %v48 = vsel %vm46, %v47, %v45
    %49 = vrot.lane.b32.xlu0 %v23, 64
    %v50 = vpop.permute.xlu0 %49
    %v52 = vsel %vm24, %v50, 0.0
    %53 = vadd.xlane.f32.xlu0 %v52
    %v54 = vpop.xlane.xlu0 %53
    %v55 = vrsqrt.pop %v54
    %v56 = vmul.f32 %v54, %v55
    %vm57 = vcmp.eq.f32.partialorder %v54, inf
    %v58 = vsel %vm57, %v54, %v56
    %vm59 = vcmp.eq.f32.partialorder %v54, 0.0
    %v60 = vand.u32 %v54, 2147483648
    %v61 = vsel %vm59, %v60, %v58
    %62 = vrot.lane.b32.xlu0 %v23, 32
    %v63 = vpop.permute.xlu0 %62
    %v65 = vsel %vm24, %v63, 0.0
    %66 = vadd.xlane.f32.xlu0 %v65
    %v67 = vpop.xlane.xlu0 %66
    %v68 = vrsqrt.pop %v67
    %v69 = vmul.f32 %v67, %v68
    %vm70 = vcmp.eq.f32.partialorder %v67, inf
    %v71 = vsel %vm70, %v67, %v69
    %vm72 = vcmp.eq.f32.partialorder %v67, 0.0
    %v73 = vand.u32 %v67, 2147483648
    %v74 = vsel %vm72, %v73, %v71
    %v75 = vadd.f32 %v34, %v48
    %v76 = vadd.f32 %v75, %v61
    %v77 = vadd.f32 %v76, %v74
    %vm78 = vcmask 1024
    %v79 = vsel %vm78, %v77, 0.0
    %80 = vadd.xlane.f32.xlu0 %v79
    %v81 = vpop.xlane.xlu0 %80
    %v82 = vrot.slane %v81, 4
    %v83 = vadd.f32 %v81, %v82
    %v84 = vrot.slane %v83, 2
    %v85 = vadd.f32 %v83, %v84
    %v86 = vrot.slane %v85, 1
    %v87 = vadd.f32 %v85, %v86
    %s88 = vtos %v87
    %s89 = smul.f32 %s88, 0.125
    %s90 = sadd.f32 %s89, 1e-12
    %v91 = vstv %s89
    %v92 = vsub.f32 %v34, %v91
    %v93 = vmul.f32 %v92, %v92
    %v94 = vsub.f32 %v48, %v91
    %v95 = vmul.f32 %v94, %v94
    %v96 = vadd.f32 %v93, %v95
    %v97 = vsub.f32 %v61, %v91
    %v98 = vmul.f32 %v97, %v97
    %v99 = vadd.f32 %v96, %v98
    %v100 = vsub.f32 %v74, %v91
    %v101 = vmul.f32 %v100, %v100
    %v102 = vadd.f32 %v99, %v101
    %v103 = vsel %vm78, %v102, 0.0
    %104 = vadd.xlane.f32.xlu0 %v103
    %v105 = vpop.xlane.xlu0 %104
    %v106 = vrot.slane %v105, 4
    %v107 = vadd.f32 %v105, %v106
    %v108 = vrot.slane %v107, 2
    %v109 = vadd.f32 %v107, %v108
    %v110 = vrot.slane %v109, 1
    %v111 = vadd.f32 %v109, %v110
    %s112 = vtos %v111
    %s113 = smul.f32 %s112, 0.125
    %s114 = smax.f32 %s113, 1e-12
    %v115 = vstv %s114
    %v116 = vrsqrt.pop %v115
    %v117 = vmul.f32 %v115, %v116
    %vm118 = vcmp.eq.f32.partialorder %v115, inf
    %v119 = vsel %vm118, %v115, %v117
    %vm120 = vcmp.eq.f32.partialorder %v115, 0.0
    %v121 = vand.u32 %v115, 2147483648
    %v122 = vsel %vm120, %v121, %v119
    %s123 = vtos %v122
    %s124 = sadd.f32 %s90, %s123
    %v125 = vstv %s124
    %v126 = vrcp.pop %v125
    %s127 = vtos %v126
    %v128 = vstv %s127
    %v129 = vmul.f32 %v22, %v128
    %130 = vst [vmem:[#allocation4] sm:$0x3] %v129
    %s131 = sld [smem:[#allocation2]]
    %s132 = smul.f32 %s131, 0.99
    %s133 = smul.f32 %s90, 0.01
    %s134 = sadd.f32 %s132, %s133
    %s135 = scalar_lea.smem [#allocation7], 0
    %136 = sst [smem:[%s135]] %s134
    %s137 = sld [smem:[#allocation3]]
    %s138 = smul.f32 %s137, 0.99
    %s139 = smul.f32 %s113, 0.01
    %s140 = sadd.f32 %s138, %s139
    %s141 = scalar_lea.smem [#allocation8], 0
    %142 = sst [smem:[%s141]] %s140
    // Predicated region
    $region14: #{tpu_custom_call.1} parent=1 // pred_check
      _
    $region15: #{tpu_custom_call.1} parent=1 // pred_check_branch
      %144 = sbr.rel (0) target = $region17
    $region16: #{tpu_custom_call.1} parent=1 // pred_region
      %s146 = ssub.s32 32, 32
      %147 = vsyncadd [#allocation5], %s146
      %s149 = sshll.u32 [#allocation4], 4
      %s150 = int_to_ptr.vmem [resolvable:$true] %s149
      %152 = dma.vmem_to_hbm [thread:$0]  %s150, 32, %s3, [#allocation5]
    $region17: #{tpu_custom_call.1} parent=1 // pred_fallthru
      _
    // Predicated region
    $region18: #{tpu_custom_call.1} parent=1 // pred_check
      _
    $region19: #{tpu_custom_call.1} parent=1 // pred_check_branch
      %154 = sbr.rel (0) target = $region21
    $region20: #{tpu_custom_call.1} parent=1 // pred_region
      %s156 = ssub.s32 16, 16
      %157 = vsyncadd [#allocation6], %s156
      %160 = dma.smem_to_hbm [#allocation7], 16, %s4, [#allocation6]
    $region21: #{tpu_custom_call.1} parent=1 // pred_fallthru
      _
    // Predicated region
    $region22: #{tpu_custom_call.1} parent=1 // pred_check
      _
    $region23: #{tpu_custom_call.1} parent=1 // pred_check_branch
      %162 = sbr.rel (0) target = $region25
    $region24: #{tpu_custom_call.1} parent=1 // pred_region
      %s164 = ssub.s32 16, 16
      %165 = vsyncadd [#allocation9], %s164
      %168 = dma.smem_to_hbm [#allocation8], 16, %s5, [#allocation9]
    $region25: #{tpu_custom_call.1} parent=1 // pred_fallthru
      _
    // Predicated region
    $region26: #{tpu_custom_call.1} parent=1 // pred_check
      _
    $region27: #{tpu_custom_call.1} parent=1 // pred_check_branch
      %170 = sbr.rel (0) target = $region29
    $region28: #{tpu_custom_call.1} parent=1 // pred_region
      %171 = dma.done [#allocation5], 32
    $region29: #{tpu_custom_call.1} parent=1 // pred_fallthru
      _
    // Predicated region
    $region30: #{tpu_custom_call.1} parent=1 // pred_check
      _
    $region31: #{tpu_custom_call.1} parent=1 // pred_check_branch
      %173 = sbr.rel (0) target = $region33
    $region32: #{tpu_custom_call.1} parent=1 // pred_region
      %174 = dma.done [#allocation6], 16
    $region33: #{tpu_custom_call.1} parent=1 // pred_fallthru
      _
    // Predicated region
    $region34: #{tpu_custom_call.1} parent=1 // pred_check
      _
    $region35: #{tpu_custom_call.1} parent=1 // pred_check_branch
      %176 = sbr.rel (0) target = $region37
    $region36: #{tpu_custom_call.1} parent=1 // pred_region
      %177 = dma.done [#allocation9], 16
    $region37: #{tpu_custom_call.1} parent=1 // pred_fallthru
      _
    %178 = sfence
    %179 = vsyncpa [#allocation5], 1
    %180 = vsyncpa [#allocation6], 1
    %181 = vsyncpa [#allocation9], 1

</llo_original>
